<compile_context>
chip_gen: v7x
topology: tpu7x:2x2x1
jax: 0.10.0
libtpu: 0.0.40
codegen_flags: <defaults>
</compile_context>

<pallas_src>
import math

import jax
import jax.numpy as jnp
from jax.experimental import pallas as pl
from jax.experimental.pallas import tpu as pltpu


def _round_up(a, b):
    return (a + b - 1) // b * b


def _row_tile(rows, cap):
    for t in (512, 256, 128, 64, 32, 16):
        if t <= cap and rows % t == 0:
            return t
    return rows  # fall back to a single full-extent block


# ----------------------------- kernel 1: Q/K projection ----------------------
def _proj_kernel(x_ref, wq_ref, bq_ref, wk_ref, bk_ref, q_ref, k_ref):
    x = x_ref[...]                                                    # (tm, Dp)
    q = jnp.dot(x, wq_ref[...], preferred_element_type=jnp.float32) + bq_ref[...]
    k = jnp.dot(x, wk_ref[...], preferred_element_type=jnp.float32) + bk_ref[...]
    q_ref[...] = q.astype(q_ref.dtype)
    k_ref[...] = k.astype(k_ref.dtype)


# ----------------------------- kernel 2: flash attention ---------------------
def _make_flash_kernel(scale, seq_len, kv_tile, need_mask):
    def kernel(q_ref, k_ref, v_ref, o_ref, m_sc, l_sc, acc_sc):
        ki = pl.program_id(2)

        @pl.when(ki == 0)
        def _init():
            m_sc[...] = jnp.full(m_sc.shape, -jnp.inf, dtype=m_sc.dtype)
            l_sc[...] = jnp.zeros(l_sc.shape, dtype=l_sc.dtype)
            acc_sc[...] = jnp.zeros(acc_sc.shape, dtype=acc_sc.dtype)

        q = q_ref[0]                                                  # (tq, Dp)
        k = k_ref[0]                                                  # (tk, Dp)
        # Contract last dims of q and k directly (trans_b) - no explicit k.T.
        s = jax.lax.dot_general(
            q, k, (((1,), (1,)), ((), ())),
            preferred_element_type=jnp.float32) * scale               # (tq, tk) f32

        if need_mask:  # static: only emitted when the sequence was padded
            col = ki * kv_tile + jax.lax.broadcasted_iota(jnp.int32, s.shape, 1)
            s = jnp.where(col < seq_len, s, -1e30)

        m_prev = m_sc[...]
        m_new = jnp.maximum(m_prev, jnp.max(s, axis=-1, keepdims=True))
        alpha = jnp.exp(m_prev - m_new)                               # f32
        p = jnp.exp(s - m_new)                                        # f32
        l_sc[...] = alpha * l_sc[...] + jnp.sum(p, axis=-1, keepdims=True)
        acc_sc[...] = alpha * acc_sc[...] + jnp.dot(
            p.astype(v_ref.dtype), v_ref[0], preferred_element_type=jnp.float32)
        m_sc[...] = m_new

        @pl.when(ki == pl.num_programs(2) - 1)
        def _finalize():
            inv = pl.reciprocal(l_sc[...], approx=True)               # EUP vrcp
            o_ref[0] = (acc_sc[...] * inv).astype(o_ref.dtype)

    return kernel


# ----------------------------- wrapper ---------------------------------------
def attention(x, v, wq, bq, wk, bk, *, compute_dtype=jnp.bfloat16,
              seq_tile=256, row_tile=512):
    """x, v: (B, S, D); wq/wk: (D, D) PyTorch (out, in) layout; bq/bk: (D,)."""
    B, S, D = x.shape
    out_dtype = x.dtype
    scale = 1.0 / math.sqrt(float(D))

    # ---- lane-dense / tile-friendly padding --------------------------------
    Dp = _round_up(D, 128)                        # lane-dense feature dim
    seq_tile = max(8, _round_up(seq_tile, 8))
    t = min(seq_tile, _round_up(S, 8))            # q / kv tile size
    Sp = _round_up(S, t)
    need_mask = Sp != S

    xp = jnp.pad(x, ((0, 0), (0, Sp - S), (0, Dp - D))).astype(compute_dtype)
    vp = jnp.pad(v, ((0, 0), (0, Sp - S), (0, Dp - D))).astype(compute_dtype)
    wq_t = jnp.pad(wq.T, ((0, Dp - D), (0, Dp - D))).astype(compute_dtype)
    wk_t = jnp.pad(wk.T, ((0, Dp - D), (0, Dp - D))).astype(compute_dtype)
    bq2 = jnp.pad(bq, (0, Dp - D)).reshape(1, Dp).astype(jnp.float32)
    bk2 = jnp.pad(bk, (0, Dp - D)).reshape(1, Dp).astype(jnp.float32)

    cbytes = jnp.dtype(compute_dtype).itemsize
    obytes = jnp.dtype(out_dtype).itemsize
    vmem_limit = 48 * 1024 * 1024  # headroom under v7x's 64 MiB / TC

    # ---- kernel 1: fused Q/K projection over (B*Sp, Dp) rows ---------------
    R = B * Sp
    tm = _row_tile(R, row_tile)
    x2d = xp.reshape(R, Dp)
    proj_cost = pl.CostEstimate(
        flops=int(2 * 2 * R * Dp * Dp),
        transcendentals=0,
        bytes_accessed=int(3 * R * Dp * cbytes + 2 * Dp * Dp * cbytes + 2 * Dp * 4),
    )
    q2d, k2d = pl.pallas_call(
        _proj_kernel,
        out_shape=(jax.ShapeDtypeStruct((R, Dp), compute_dtype),
                   jax.ShapeDtypeStruct((R, Dp), compute_dtype)),
        grid_spec=pltpu.PrefetchScalarGridSpec(
            num_scalar_prefetch=0,
            grid=(R // tm,),
            in_specs=[
                pl.BlockSpec((tm, Dp), lambda i: (i, 0)),   # x rows
                pl.BlockSpec((Dp, Dp), lambda i: (0, 0)),   # Wq^T (resident)
                pl.BlockSpec((1, Dp), lambda i: (0, 0)),    # bq
                pl.BlockSpec((Dp, Dp), lambda i: (0, 0)),   # Wk^T (resident)
                pl.BlockSpec((1, Dp), lambda i: (0, 0)),    # bk
            ],
            out_specs=[pl.BlockSpec((tm, Dp), lambda i: (i, 0)),
                       pl.BlockSpec((tm, Dp), lambda i: (i, 0))],
        ),
        compiler_params=pltpu.CompilerParams(
            dimension_semantics=("parallel",),
            vmem_limit_bytes=vmem_limit,
        ),
        cost_estimate=proj_cost,
    )(x2d, wq_t, bq2, wk_t, bk2)

    q3 = q2d.reshape(B, Sp, Dp)
    k3 = k2d.reshape(B, Sp, Dp)

    # ---- kernel 2: flash attention ------------------------------------------
    nq = Sp // t
    nk = Sp // t
    flash_cost = pl.CostEstimate(
        flops=int(2 * 2 * B * Sp * Sp * Dp),
        transcendentals=int(B * Sp * Sp),
        bytes_accessed=int(3 * B * Sp * Dp * cbytes + B * Sp * Dp * obytes),
    )
    out = pl.pallas_call(
        _make_flash_kernel(scale, S, t, need_mask),
        out_shape=jax.ShapeDtypeStruct((B, Sp, Dp), out_dtype),
        grid_spec=pltpu.PrefetchScalarGridSpec(
            num_scalar_prefetch=0,
            grid=(B, nq, nk),
            in_specs=[
                pl.BlockSpec((1, t, Dp), lambda b, qi, ki: (b, qi, 0)),  # q
                pl.BlockSpec((1, t, Dp), lambda b, qi, ki: (b, ki, 0)),  # k
                pl.BlockSpec((1, t, Dp), lambda b, qi, ki: (b, ki, 0)),  # v
            ],
            out_specs=pl.BlockSpec((1, t, Dp), lambda b, qi, ki: (b, qi, 0)),
            scratch_shapes=[
                pltpu.VMEM((t, 1), jnp.float32),    # running max  m
                pltpu.VMEM((t, 1), jnp.float32),    # running sum  l
                pltpu.VMEM((t, Dp), jnp.float32),   # output accumulator
            ],
        ),
        compiler_params=pltpu.CompilerParams(
            dimension_semantics=("parallel", "parallel", "arbitrary"),
            vmem_limit_bytes=vmem_limit,
        ),
        cost_estimate=flash_cost,
    )(q3, k3, vp)

    return out[:, :S, :D]


# ----------------------------- pure-JAX reference ----------------------------
def attention_ref(x, v, wq, bq, wk, bk):
    q = jnp.einsum("bsd,ed->bse", x, wq) + bq
    k = jnp.einsum("bsd,ed->bse", x, wk) + bk
    scores = jnp.einsum("bqd,bkd->bqk", q, k) / math.sqrt(x.shape[-1])
    p = jax.nn.softmax(scores, axis=-1)
    return jnp.einsum("bqk,bkd->bqd", p, v)


def _make_inputs(key, B, S, D):
    kx, kv, kwq, kbq, kwk, kbk = jax.random.split(key, 6)
    x = jax.random.normal(kx, (B, S, D), dtype=jnp.float32)
    v = jax.random.normal(kv, (B, S, D), dtype=jnp.float32)
    # PyTorch nn.Linear default init: U(-1/sqrt(fan_in), 1/sqrt(fan_in))
    bound = 1.0 / math.sqrt(D)
    wq = jax.random.uniform(kwq, (D, D), minval=-bound, maxval=bound, dtype=jnp.float32)
    bq = jax.random.uniform(kbq, (D,), minval=-bound, maxval=bound, dtype=jnp.float32)
    wk = jax.random.uniform(kwk, (D, D), minval=-bound, maxval=bound, dtype=jnp.float32)
    bk = jax.random.uniform(kbk, (D,), minval=-bound, maxval=bound, dtype=jnp.float32)
    return x, v, wq, bq, wk, bk


if __name__ == "__main__":
    key = jax.random.PRNGKey(0)
    k1, k2 = jax.random.split(key)

    # Case 1: module-sized shapes (batch=2, seq=8, hidden=32).
    B, S, D = 2, 8, 32
    x, v, wq, bq, wk, bk = _make_inputs(k1, B, S, D)
    ref = attention_ref(x, v, wq, bq, wk, bk)

    out_f32 = attention(x, v, wq, bq, wk, bk, compute_dtype=jnp.float32)
    jax.block_until_ready(out_f32)
    assert out_f32.shape == (B, S, D)
    assert jnp.allclose(out_f32, ref, atol=5e-3, rtol=5e-3), "f32 path mismatch"

    out_bf16 = attention(x, v, wq, bq, wk, bk)  # default bf16 MXU fast path
    jax.block_until_ready(out_bf16)
    assert out_bf16.shape == (B, S, D)
    assert jnp.allclose(out_bf16, ref, atol=1e-1, rtol=1e-1), "bf16 path mismatch"

    # Case 2: sequence that exercises padding/masking and multiple q/kv tiles.
    B2, S2, D2 = 1, 320, 32
    x2, v2, wq2, bq2, wk2, bk2 = _make_inputs(k2, B2, S2, D2)
    ref2 = attention_ref(x2, v2, wq2, bq2, wk2, bk2)
    out2 = attention(x2, v2, wq2, bq2, wk2, bk2, compute_dtype=jnp.float32)
    jax.block_until_ready(out2)
    assert out2.shape == (B2, S2, D2)
    assert jnp.allclose(out2, ref2, atol=5e-3, rtol=5e-3), "tiled/masked path mismatch"

    print("KERNEL_OK")
</pallas_src>

<mosaic_0001>
module attributes {stable_mosaic.version = 11 : i64} {
  func.func @_proj_kernel(%arg0: i32, %arg1: memref<16x128xf32, #tpu.memory_space<vmem>>, %arg2: memref<128x128xf32, #tpu.memory_space<vmem>>, %arg3: memref<1x128xf32, #tpu.memory_space<vmem>>, %arg4: memref<128x128xf32, #tpu.memory_space<vmem>>, %arg5: memref<1x128xf32, #tpu.memory_space<vmem>>, %arg6: memref<16x128xf32, #tpu.memory_space<vmem>>, %arg7: memref<16x128xf32, #tpu.memory_space<vmem>>) attributes {dimension_semantics = [#tpu.dimension_semantics<parallel>], iteration_bounds = array<i64: 1>, scalar_prefetch = 0 : i64, scratch_operands = 0 : i64, tpu.core_type = #tpu.core_type<tc>, window_params = [{transform_indices = @transform_0, window_bounds = array<i64: 16, 128>}, {pipeline_mode = #tpu.pipeline_mode<synchronous>, transform_indices = @transform_1, window_bounds = array<i64: 128, 128>}, {pipeline_mode = #tpu.pipeline_mode<synchronous>, transform_indices = @transform_2, window_bounds = array<i64: 1, 128>}, {pipeline_mode = #tpu.pipeline_mode<synchronous>, transform_indices = @transform_3, window_bounds = array<i64: 128, 128>}, {pipeline_mode = #tpu.pipeline_mode<synchronous>, transform_indices = @transform_4, window_bounds = array<i64: 1, 128>}, {transform_indices = @transform_5, window_bounds = array<i64: 16, 128>}, {transform_indices = @transform_6, window_bounds = array<i64: 16, 128>}]} {
    %c0 = arith.constant 0 : index
    %c0_0 = arith.constant 0 : index
    %0 = vector.load %arg1[%c0, %c0_0] : memref<16x128xf32, #tpu.memory_space<vmem>>, vector<16x128xf32>
    %c0_1 = arith.constant 0 : index
    %c0_2 = arith.constant 0 : index
    %1 = vector.load %arg2[%c0_1, %c0_2] : memref<128x128xf32, #tpu.memory_space<vmem>>, vector<128x128xf32>
    %cst = arith.constant dense<0.000000e+00> : vector<16x128xf32>
    %2 = tpu.matmul %0, %1, %cst {dimension_numbers = #tpu.dot_dimension_numbers<[1], [0], [0], [1], [0, 0, 1, 1], [], []>} : vector<16x128xf32>, vector<128x128xf32>, vector<16x128xf32> -> vector<16x128xf32>
    %c0_3 = arith.constant 0 : index
    %c0_4 = arith.constant 0 : index
    %3 = vector.load %arg3[%c0_3, %c0_4] : memref<1x128xf32, #tpu.memory_space<vmem>>, vector<1x128xf32>
    %4 = vector.broadcast %3 : vector<1x128xf32> to vector<16x128xf32>
    %5 = arith.addf %2, %4 : vector<16x128xf32>
    %c0_5 = arith.constant 0 : index
    %c0_6 = arith.constant 0 : index
    %6 = vector.load %arg4[%c0_5, %c0_6] : memref<128x128xf32, #tpu.memory_space<vmem>>, vector<128x128xf32>
    %cst_7 = arith.constant dense<0.000000e+00> : vector<16x128xf32>
    %7 = tpu.matmul %0, %6, %cst_7 {dimension_numbers = #tpu.dot_dimension_numbers<[1], [0], [0], [1], [0, 0, 1, 1], [], []>} : vector<16x128xf32>, vector<128x128xf32>, vector<16x128xf32> -> vector<16x128xf32>
    %c0_8 = arith.constant 0 : index
    %c0_9 = arith.constant 0 : index
    %8 = vector.load %arg5[%c0_8, %c0_9] : memref<1x128xf32, #tpu.memory_space<vmem>>, vector<1x128xf32>
    %9 = vector.broadcast %8 : vector<1x128xf32> to vector<16x128xf32>
    %10 = arith.addf %7, %9 : vector<16x128xf32>
    %c0_10 = arith.constant 0 : index
    %c0_11 = arith.constant 0 : index
    %11 = vector.load %arg6[%c0_10, %c0_11] : memref<16x128xf32, #tpu.memory_space<vmem>>, vector<16x128xf32>
    tpu.vector_store %arg6[%c0_10, %c0_11], %5 {strides = array<i32>} : memref<16x128xf32, #tpu.memory_space<vmem>>, vector<16x128xf32>,
    %c0_12 = arith.constant 0 : index
    %c0_13 = arith.constant 0 : index
    %12 = vector.load %arg7[%c0_12, %c0_13] : memref<16x128xf32, #tpu.memory_space<vmem>>, vector<16x128xf32>
    tpu.vector_store %arg7[%c0_12, %c0_13], %10 {strides = array<i32>} : memref<16x128xf32, #tpu.memory_space<vmem>>, vector<16x128xf32>,
    return
  }
  func.func @transform_0(%arg0: i32) -> (i32, i32) {
    %c0_i32 = arith.constant 0 : i32
    %c0_i32_0 = arith.constant 0 : i32
    return %arg0, %c0_i32 : i32, i32
  }
  func.func @transform_1(%arg0: i32) -> (i32, i32) {
    %c0_i32 = arith.constant 0 : i32
    %c0_i32_0 = arith.constant 0 : i32
    %c0_i32_1 = arith.constant 0 : i32
    return %c0_i32, %c0_i32_0 : i32, i32
  }
  func.func @transform_2(%arg0: i32) -> (i32, i32) {
    %c0_i32 = arith.constant 0 : i32
    %c0_i32_0 = arith.constant 0 : i32
    %c0_i32_1 = arith.constant 0 : i32
    return %c0_i32, %c0_i32_0 : i32, i32
  }
  func.func @transform_3(%arg0: i32) -> (i32, i32) {
    %c0_i32 = arith.constant 0 : i32
    %c0_i32_0 = arith.constant 0 : i32
    %c0_i32_1 = arith.constant 0 : i32
    return %c0_i32, %c0_i32_0 : i32, i32
  }
  func.func @transform_4(%arg0: i32) -> (i32, i32) {
    %c0_i32 = arith.constant 0 : i32
    %c0_i32_0 = arith.constant 0 : i32
    %c0_i32_1 = arith.constant 0 : i32
    return %c0_i32, %c0_i32_0 : i32, i32
  }
  func.func @transform_5(%arg0: i32) -> (i32, i32) {
    %c0_i32 = arith.constant 0 : i32
    %c0_i32_0 = arith.constant 0 : i32
    return %arg0, %c0_i32 : i32, i32
  }
  func.func @transform_6(%arg0: i32) -> (i32, i32) {
    %c0_i32 = arith.constant 0 : i32
    %c0_i32_0 = arith.constant 0 : i32
    return %arg0, %c0_i32 : i32, i32
  }
}

</mosaic_0001>

<llo_original>
// kernel: tpu_custom_call.1
$region0: #{tpu_custom_call.1}
  #allocation0 [shape = 'u32[]', space=smem, size = 0x4, offset = 0x4, fixed_abs, tag = 'smem constant byte address 0x4 - core index']
  #allocation1 [shape = 'u32[144,128]{1,0:T(1,128)}', space=vmem, size = 0x12000, scoped, tag = 'internal scratch']
  %s0 = inlined_call_operand.hbm [shape: f32[16,128], index: 0, kind: input, shape index: {}]
  %s1 = inlined_call_operand.hbm [shape: f32[128,128], index: 1, kind: input, shape index: {}]
  %s2 = inlined_call_operand.vmem [shape: f32[1,128], index: 2, kind: input, shape index: {}]
  %s3 = inlined_call_operand.hbm [shape: f32[128,128], index: 3, kind: input, shape index: {}]
  %s4 = inlined_call_operand.vmem [shape: f32[1,128], index: 4, kind: input, shape index: {}]
  %s5 = inlined_call_operand.hbm [shape: f32[16,128], index: 5, kind: output, shape index: {0}]
  %s6 = inlined_call_operand.hbm [shape: f32[16,128], index: 6, kind: output, shape index: {1}]
  %7 = xla_tuple %s5, %s6
  %s8 = sld [smem:[#allocation0]]
  $region50: #{tpu_custom_call.1} parent=0
    _
  %s10 = ssub.s32 1, %s8
  %s11 = scalar_select 0, %s10, %s8
  $region1: #{tpu_custom_call.1} parent=0
    #allocation2 [shape = 'u8[8192]{0}', space=vmem, size = 0x2000, scoped, tag = 'input window, operand 0, single buffered']
    #allocation3 [shape = 's32[1]{0}', space=sflag, size = 0x4, scoped, tag = 'scoped memory for tpu_custom_call.1']
    #allocation4 [shape = 's32[1]{0}', space=sflag, size = 0x4, scoped, tag = 'scoped memory for tpu_custom_call.1']
    #allocation5 [shape = 'u8[65536]{0}', space=vmem, size = 0x10000, scoped, tag = 'input window, operand 1, single buffered']
    #allocation6 [shape = 's32[1]{0}', space=sflag, size = 0x4, scoped, tag = 'scoped memory for tpu_custom_call.1']
    #allocation7 [shape = 'u8[65536]{0}', space=vmem, size = 0x10000, scoped, tag = 'input window, operand 3, single buffered']
    #allocation8 [shape = 'u8[8192]{0}', space=vmem, size = 0x2000, scoped, tag = 'output window, operand 0, single buffered']
    #allocation9 [shape = 'u8[8192]{0}', space=vmem, size = 0x2000, scoped, tag = 'output window, operand 1, single buffered']
    #allocation10 [shape = 's32[1]{0}', space=sflag, size = 0x4, scoped, tag = 'scoped memory for tpu_custom_call.1']
    %12 = vsyncpa [#allocation3], 0
    %13 = vsyncpa [#allocation6], 0
    %14 = vsyncpa [#allocation4], 0
    %15 = vsyncpa [#allocation10], 0
    // Predicated region
    $region2: #{tpu_custom_call.1} parent=1 // pred_check
      _
    $region3: #{tpu_custom_call.1} parent=1 // pred_check_branch
      %17 = sbr.rel (0) target = $region5
    $region4: #{tpu_custom_call.1} parent=1 // pred_region
      %s19 = ssub.s32 256, 256
      %20 = vsyncadd [#allocation3], %s19
      %s21 = sshll.u32 [#allocation2], 4
      %s22 = int_to_ptr.vmem [resolvable:$true] %s21
      %27 = dma.hbm_to_vmem [thread:$0]  %s0, 256, %s22, [#allocation3], 128, 128, 8
    $region5: #{tpu_custom_call.1} parent=1 // pred_fallthru
      _
    // Predicated region
    $region6: #{tpu_custom_call.1} parent=1 // pred_check
      _
    $region7: #{tpu_custom_call.1} parent=1 // pred_check_branch
      %29 = sbr.rel (0) target = $region9
    $region8: #{tpu_custom_call.1} parent=1 // pred_region
      %s31 = ssub.s32 2048, 2048
      %32 = vsyncadd [#allocation6], %s31
      %s33 = sshll.u32 [#allocation5], 4
      %s34 = int_to_ptr.vmem [resolvable:$true] %s33
      %39 = dma.hbm_to_vmem [thread:$0]  %s1, 2048, %s34, [#allocation6], 128, 128, 8
    $region9: #{tpu_custom_call.1} parent=1 // pred_fallthru
      _
    // Predicated region
    $region10: #{tpu_custom_call.1} parent=1 // pred_check
      _
    $region11: #{tpu_custom_call.1} parent=1 // pred_check_branch
      %41 = sbr.rel (0) target = $region13
    $region12: #{tpu_custom_call.1} parent=1 // pred_region
      _
    $region13: #{tpu_custom_call.1} parent=1 // pred_fallthru
      _
    // Predicated region
    $region14: #{tpu_custom_call.1} parent=1 // pred_check
      _
    $region15: #{tpu_custom_call.1} parent=1 // pred_check_branch
      %43 = sbr.rel (0) target = $region17
    $region16: #{tpu_custom_call.1} parent=1 // pred_region
      %s45 = ssub.s32 2048, 2048
      %46 = vsyncadd [#allocation6], %s45
      %s47 = sshll.u32 [#allocation7], 4
      %s48 = int_to_ptr.vmem [resolvable:$true] %s47
      %53 = dma.hbm_to_vmem [thread:$0]  %s3, 2048, %s48, [#allocation6], 128, 128, 8
    $region17: #{tpu_custom_call.1} parent=1 // pred_fallthru
      _
    // Predicated region
    $region18: #{tpu_custom_call.1} parent=1 // pred_check
      _
    $region19: #{tpu_custom_call.1} parent=1 // pred_check_branch
      %55 = sbr.rel (0) target = $region21
    $region20: #{tpu_custom_call.1} parent=1 // pred_region
      _
    $region21: #{tpu_custom_call.1} parent=1 // pred_fallthru
      _
    // Predicated region
    $region22: #{tpu_custom_call.1} parent=1 // pred_check
      _
    $region23: #{tpu_custom_call.1} parent=1 // pred_check_branch
      %57 = sbr.rel (0) target = $region25
    $region24: #{tpu_custom_call.1} parent=1 // pred_region
      %58 = dma.done [#allocation3], 256
    $region25: #{tpu_custom_call.1} parent=1 // pred_fallthru
      _
    // Predicated region
    $region26: #{tpu_custom_call.1} parent=1 // pred_check
      _
    $region27: #{tpu_custom_call.1} parent=1 // pred_check_branch
      %60 = sbr.rel (0) target = $region29
    $region28: #{tpu_custom_call.1} parent=1 // pred_region
      %61 = dma.done [#allocation6], 2048
    $region29: #{tpu_custom_call.1} parent=1 // pred_fallthru
      _
    // Predicated region
    $region30: #{tpu_custom_call.1} parent=1 // pred_check
      _
    $region31: #{tpu_custom_call.1} parent=1 // pred_check_branch
      %63 = sbr.rel (0) target = $region33
    $region32: #{tpu_custom_call.1} parent=1 // pred_region
      %64 = dma.done [#allocation6], 2048
    $region33: #{tpu_custom_call.1} parent=1 // pred_fallthru
      _
    %v65 = vld [vmem:[#allocation2] sm:$0xff]
    %v66 = vld [vmem:[#allocation2 + $0x8] sm:$0xff]
    %v67 = vld [vmem:[#allocation5] sm:$0xff]
    %v68 = vld [vmem:[#allocation5 + $0x8] sm:$0xff]
    %v69 = vld [vmem:[#allocation5 + $0x10] sm:$0xff]
    %v70 = vld [vmem:[#allocation5 + $0x18] sm:$0xff]
    %v71 = vld [vmem:[#allocation5 + $0x20] sm:$0xff]
    %v72 = vld [vmem:[#allocation5 + $0x28] sm:$0xff]
    %v73 = vld [vmem:[#allocation5 + $0x30] sm:$0xff]
    %v74 = vld [vmem:[#allocation5 + $0x38] sm:$0xff]
    %v75 = vld [vmem:[#allocation5 + $0x40] sm:$0xff]
    %v76 = vld [vmem:[#allocation5 + $0x48] sm:$0xff]
    %v77 = vld [vmem:[#allocation5 + $0x50] sm:$0xff]
    %v78 = vld [vmem:[#allocation5 + $0x58] sm:$0xff]
    %v79 = vld [vmem:[#allocation5 + $0x60] sm:$0xff]
    %v80 = vld [vmem:[#allocation5 + $0x68] sm:$0xff]
    %v81 = vld [vmem:[#allocation5 + $0x70] sm:$0xff]
    %v82 = vld [vmem:[#allocation5 + $0x78] sm:$0xff]
    %v83 = vld [vmem:[%s2] sm:$0x1]
    %v85 = vlaneseq
    %v86 = vshrl.u32 %v85, 7
    %v87 = vsub.s32 0, %v86
    %v88 = vrot.slane %v83, %v87
    %90 = vmatprep.subr.mxu0 0.0
    %91 = vmatpush1.msra.mxu0 %v67
    %92 = vmatprep.subr.mxu0 0.0
    %93 = vmatpush1.msra.mxu0 %v68
    %94 = vmatprep.subr.mxu0 0.0
    %95 = vmatpush1.msra.mxu0 %v69
    %96 = vmatprep.subr.mxu0 0.0
    %97 = vmatpush1.msra.mxu0 %v70
    %98 = vmatprep.subr.mxu0 0.0
    %99 = vmatpush1.msra.mxu0 %v71
    %100 = vmatprep.subr.mxu0 0.0
    %101 = vmatpush1.msra.mxu0 %v72
    %102 = vmatprep.subr.mxu0 0.0
    %103 = vmatpush1.msra.mxu0 %v73
    %104 = vmatprep.subr.mxu0 0.0
    %105 = vmatpush1.msra.mxu0 %v74
    %106 = vmatprep.subr.mxu0 0.0
    %107 = vmatpush1.msra.mxu0 %v75
    %108 = vmatprep.subr.mxu0 0.0
    %109 = vmatpush1.msra.mxu0 %v76
    %110 = vmatprep.subr.mxu0 0.0
    %111 = vmatpush1.msra.mxu0 %v77
    %112 = vmatprep.subr.mxu0 0.0
    %113 = vmatpush1.msra.mxu0 %v78
    %114 = vmatprep.subr.mxu0 0.0
    %115 = vmatpush1.msra.mxu0 %v79
    %116 = vmatprep.subr.mxu0 0.0
    %117 = vmatpush1.msra.mxu0 %v80
    %118 = vmatprep.subr.mxu0 0.0
    %119 = vmatpush1.msra.mxu0 %v81
    %120 = vmatprep.subr.mxu0 0.0
    %121 = vmatpush1.msra.mxu0 %v82
    %122 = vmatprep.subr.mxu0 0.0
    %123 = vmatpush1.msra.mxu0 0.0
    %124 = vmatprep.subr.mxu0 0.0
    %125 = vmatpush1.msra.mxu0 0.0
    %126 = vmatprep.subr.mxu0 0.0
    %127 = vmatpush1.msra.mxu0 0.0
    %128 = vmatprep.subr.mxu0 0.0
    %129 = vmatpush1.msra.mxu0 0.0
    %130 = vmatprep.subr.mxu0 0.0
    %131 = vmatpush1.msra.mxu0 0.0
    %132 = vmatprep.subr.mxu0 0.0
    %133 = vmatpush1.msra.mxu0 0.0
    %134 = vmatprep.subr.mxu0 0.0
    %135 = vmatpush1.msra.mxu0 0.0
    %136 = vmatprep.subr.mxu0 0.0
    %137 = vmatpush1.msra.mxu0 0.0
    %138 = vmatprep.subr.mxu0 0.0
    %139 = vmatpush1.msra.mxu0 0.0
    %140 = vmatprep.subr.mxu0 0.0
    %141 = vmatpush1.msra.mxu0 0.0
    %142 = vmatprep.subr.mxu0 0.0
    %143 = vmatpush1.msra.mxu0 0.0
    %144 = vmatprep.subr.mxu0 0.0
    %145 = vmatpush1.msra.mxu0 0.0
    %146 = vmatprep.subr.mxu0 0.0
    %147 = vmatpush1.msra.mxu0 0.0
    %148 = vmatprep.subr.mxu0 0.0
    %149 = vmatpush1.msra.mxu0 0.0
    %150 = vmatprep.subr.mxu0 0.0
    %151 = vmatpush1.msra.mxu0 0.0
    %152 = vmatprep.subr.mxu0 0.0
    %153 = vmatpush1.msra.mxu0 0.0
    %154 = vmatprep.mubr.f32.mxu0 0.0
    %155 = vmatmul.mubr.f32.gmra.mrb[0].mxu0 %v65
    %v156 = vpop.f32.mrb[0].mxu0
    %v157 = vadd.f32 %v88, %v156
    %v158 = vpop.f32.mrb[0].mxu0
    %159 = vmatprep.mubr.f32.mxu0 0.0
    %160 = vmatmul.mubr.f32.gmra.mrb[0].mxu0 %v66
    %v161 = vpop.f32.mrb[0].mxu0
    %v162 = vadd.f32 %v88, %v161
    %v163 = vpop.f32.mrb[0].mxu0
    %164 = vdwg.mxu0
    %v165 = vld [vmem:[#allocation7] sm:$0xff]
    %v166 = vld [vmem:[#allocation7 + $0x8] sm:$0xff]
    %v167 = vld [vmem:[#allocation7 + $0x10] sm:$0xff]
    %v168 = vld [vmem:[#allocation7 + $0x18] sm:$0xff]
    %v169 = vld [vmem:[#allocation7 + $0x20] sm:$0xff]
    %v170 = vld [vmem:[#allocation7 + $0x28] sm:$0xff]
    %v171 = vld [vmem:[#allocation7 + $0x30] sm:$0xff]
    %v172 = vld [vmem:[#allocation7 + $0x38] sm:$0xff]
    %v173 = vld [vmem:[#allocation7 + $0x40] sm:$0xff]
    %v174 = vld [vmem:[#allocation7 + $0x48] sm:$0xff]
    %v175 = vld [vmem:[#allocation7 + $0x50] sm:$0xff]
    %v176 = vld [vmem:[#allocation7 + $0x58] sm:$0xff]
    %v177 = vld [vmem:[#allocation7 + $0x60] sm:$0xff]
    %v178 = vld [vmem:[#allocation7 + $0x68] sm:$0xff]
    %v179 = vld [vmem:[#allocation7 + $0x70] sm:$0xff]
    %v180 = vld [vmem:[#allocation7 + $0x78] sm:$0xff]
    %v181 = vld [vmem:[%s4] sm:$0x1]
    %v183 = vlaneseq
    %v184 = vshrl.u32 %v183, 7
    %v185 = vsub.s32 0, %v184
    %v186 = vrot.slane %v181, %v185
    %188 = vmatprep.subr.mxu0 0.0
    %189 = vmatpush1.msra.mxu0 %v165
    %190 = vmatprep.subr.mxu0 0.0
    %191 = vmatpush1.msra.mxu0 %v166
    %192 = vmatprep.subr.mxu0 0.0
    %193 = vmatpush1.msra.mxu0 %v167
    %194 = vmatprep.subr.mxu0 0.0
    %195 = vmatpush1.msra.mxu0 %v168
    %196 = vmatprep.subr.mxu0 0.0
    %197 = vmatpush1.msra.mxu0 %v169
    %198 = vmatprep.subr.mxu0 0.0
    %199 = vmatpush1.msra.mxu0 %v170
    %200 = vmatprep.subr.mxu0 0.0
    %201 = vmatpush1.msra.mxu0 %v171
    %202 = vmatprep.subr.mxu0 0.0
    %203 = vmatpush1.msra.mxu0 %v172
    %204 = vmatprep.subr.mxu0 0.0
    %205 = vmatpush1.msra.mxu0 %v173
    %206 = vmatprep.subr.mxu0 0.0
    %207 = vmatpush1.msra.mxu0 %v174
    %208 = vmatprep.subr.mxu0 0.0
    %209 = vmatpush1.msra.mxu0 %v175
    %210 = vmatprep.subr.mxu0 0.0
    %211 = vmatpush1.msra.mxu0 %v176
    %212 = vmatprep.subr.mxu0 0.0
    %213 = vmatpush1.msra.mxu0 %v177
    %214 = vmatprep.subr.mxu0 0.0
    %215 = vmatpush1.msra.mxu0 %v178
    %216 = vmatprep.subr.mxu0 0.0
    %217 = vmatpush1.msra.mxu0 %v179
    %218 = vmatprep.subr.mxu0 0.0
    %219 = vmatpush1.msra.mxu0 %v180
    %220 = vmatprep.subr.mxu0 0.0
    %221 = vmatpush1.msra.mxu0 0.0
    %222 = vmatprep.subr.mxu0 0.0
    %223 = vmatpush1.msra.mxu0 0.0
    %224 = vmatprep.subr.mxu0 0.0
    %225 = vmatpush1.msra.mxu0 0.0
    %226 = vmatprep.subr.mxu0 0.0
    %227 = vmatpush1.msra.mxu0 0.0
    %228 = vmatprep.subr.mxu0 0.0
    %229 = vmatpush1.msra.mxu0 0.0
    %230 = vmatprep.subr.mxu0 0.0
    %231 = vmatpush1.msra.mxu0 0.0
    %232 = vmatprep.subr.mxu0 0.0
    %233 = vmatpush1.msra.mxu0 0.0
    %234 = vmatprep.subr.mxu0 0.0
    %235 = vmatpush1.msra.mxu0 0.0
    %236 = vmatprep.subr.mxu0 0.0
    %237 = vmatpush1.msra.mxu0 0.0
    %238 = vmatprep.subr.mxu0 0.0
    %239 = vmatpush1.msra.mxu0 0.0
    %240 = vmatprep.subr.mxu0 0.0
    %241 = vmatpush1.msra.mxu0 0.0
    %242 = vmatprep.subr.mxu0 0.0
    %243 = vmatpush1.msra.mxu0 0.0
    %244 = vmatprep.subr.mxu0 0.0
    %245 = vmatpush1.msra.mxu0 0.0
    %246 = vmatprep.subr.mxu0 0.0
    %247 = vmatpush1.msra.mxu0 0.0
    %248 = vmatprep.subr.mxu0 0.0
    %249 = vmatpush1.msra.mxu0 0.0
    %250 = vmatprep.subr.mxu0 0.0
    %251 = vmatpush1.msra.mxu0 0.0
    %252 = vmatprep.mubr.f32.mxu0 0.0
    %253 = vmatmul.mubr.f32.gmra.mrb[0].mxu0 %v65
    %v254 = vpop.f32.mrb[0].mxu0
    %v255 = vadd.f32 %v186, %v254
    %v256 = vpop.f32.mrb[0].mxu0
    %257 = vmatprep.mubr.f32.mxu0 0.0
    %258 = vmatmul.mubr.f32.gmra.mrb[0].mxu0 %v66
    %v259 = vpop.f32.mrb[0].mxu0
    %v260 = vadd.f32 %v186, %v259
    %v261 = vpop.f32.mrb[0].mxu0
    %262 = vdwg.mxu0
    %263 = vst [vmem:[#allocation8] sm:$0xff] %v157
    %264 = vst [vmem:[#allocation8 + $0x8] sm:$0xff] %v162
    %265 = vst [vmem:[#allocation9] sm:$0xff] %v255
    %266 = vst [vmem:[#allocation9 + $0x8] sm:$0xff] %v260
    // Predicated region
    $region34: #{tpu_custom_call.1} parent=1 // pred_check
      _
    $region35: #{tpu_custom_call.1} parent=1 // pred_check_branch
      %268 = sbr.rel (0) target = $region37
    $region36: #{tpu_custom_call.1} parent=1 // pred_region
      %s270 = ssub.s32 256, 256
      %271 = vsyncadd [#allocation4], %s270
      %s272 = sshll.u32 [#allocation8], 4
      %s273 = int_to_ptr.vmem [resolvable:$true] %s272
      %278 = dma.vmem_to_hbm [thread:$0]  %s273, 256, %s5, [#allocation4], 128, 128, 8
    $region37: #{tpu_custom_call.1} parent=1 // pred_fallthru
      _
    // Predicated region
    $region38: #{tpu_custom_call.1} parent=1 // pred_check
      _
    $region39: #{tpu_custom_call.1} parent=1 // pred_check_branch
      %280 = sbr.rel (0) target = $region41
    $region40: #{tpu_custom_call.1} parent=1 // pred_region
      %s282 = ssub.s32 256, 256
      %283 = vsyncadd [#allocation10], %s282
      %s284 = sshll.u32 [#allocation9], 4
      %s285 = int_to_ptr.vmem [resolvable:$true] %s284
      %290 = dma.vmem_to_hbm [thread:$0]  %s285, 256, %s6, [#allocation10], 128, 128, 8
    $region41: #{tpu_custom_call.1} parent=1 // pred_fallthru
      _
    // Predicated region
    $region42: #{tpu_custom_call.1} parent=1 // pred_check
      _
    $region43: #{tpu_custom_call.1} parent=1 // pred_check_branch
      %292 = sbr.rel (0) target = $region45
    $region44: #{tpu_custom_call.1} parent=1 // pred_region
      %293 = dma.done [#allocation4], 256
    $region45: #{tpu_custom_call.1} parent=1 // pred_fallthru
      _
    // Predicated region
    $region46: #{tpu_custom_call.1} parent=1 // pred_check
      _
    $region47: #{tpu_custom_call.1} parent=1 // pred_check_branch
      %295 = sbr.rel (0) target = $region49
    $region48: #{tpu_custom_call.1} parent=1 // pred_region
      %296 = dma.done [#allocation10], 256
    $region49: #{tpu_custom_call.1} parent=1 // pred_fallthru
      _
    %297 = vsyncpa [#allocation3], 1
    %298 = vsyncpa [#allocation6], 1
    %299 = vsyncpa [#allocation4], 1
    %300 = vsyncpa [#allocation10], 1

</llo_original>
